<compile_context>
chip_gen: v7x
topology: tpu7x:2x2x1
jax: 0.10.0
libtpu: 0.0.40
codegen_flags: <defaults>
</compile_context>

<pallas_src>
import functools

import jax
import jax.numpy as jnp
from jax.experimental import pallas as pl
from jax.experimental.pallas import tpu as pltpu

_LANE = 128


def _round_up(x, m):
    return ((x + m - 1) // m) * m


def _pad2d(a, rows, cols, value=0.0):
    r, c = a.shape
    if r == rows and c == cols:
        return a
    return jnp.pad(a, ((0, rows - r), (0, cols - c)), constant_values=value)


def _vmem_limit_bytes():
    """Per-generation scoped-VMEM budget (~85% of physical, capped for safety)."""
    cap = 128 * 1024 * 1024
    try:
        cap = int(getattr(pltpu.get_tpu_info(), "vmem_capacity_bytes"))
    except Exception:
        pass
    return max(32 * 1024 * 1024, min(int(cap * 0.85), 112 * 1024 * 1024))


def _select_tiles(n_pad, f_pad, out_itemsize, vmem_limit):
    """Pick (tm, tk): prefer large tk (amortize per-step overhead / big A-tile DMAs),
    then large tm, subject to a VMEM footprint budget; tm <= n_pad//2 keeps >=2 row
    tiles so the parallel axis can shard across v7x's 2 TensorCores."""
    budget = int(vmem_limit * 0.7)

    def fits(tm, tk):
        a = 2 * tm * tk * 2            # A tile, bf16, double-buffered
        x = 2 * tk * f_pad * 2         # X tile, bf16, double-buffered
        w = 2 * f_pad * f_pad * 2      # W resident (default 2 buffers)
        sh = 2 * f_pad * 4             # shift
        acc = tm * f_pad * 4           # f32 accumulator scratch
        out = 2 * tm * f_pad * out_itemsize
        return a + x + w + sh + acc + out <= budget

    tk_c = [t for t in (2048, 1024, 512, 256, 128) if t <= n_pad and n_pad % t == 0] or [n_pad]
    tm_c = [t for t in (1024, 512, 256, 128, 64) if t <= n_pad // 2 and n_pad % t == 0] or [n_pad]
    for tk in tk_c:
        for tm in tm_c:
            if fits(tm, tk):
                return tm, tk
    return tm_c[-1], tk_c[-1]


def _tile_sparsity_map(a_pad, tm, tk):
    """Per row-tile list of non-empty k-tile indices (padded by repeating the last valid
    index so skipped steps revisit the same block -> no extra DMA), plus counts."""
    n_pad = a_pad.shape[0]
    ni, nk = n_pad // tm, n_pad // tk
    nz = (a_pad != 0).reshape(ni, tm, nk, tk).any(axis=(1, 3))      # (ni, nk) bool
    kcnt = nz.sum(axis=1).astype(jnp.int32)                          # (ni,)
    max_k = max(int(jnp.max(kcnt)), 1)
    order = jnp.argsort(~nz, axis=1).astype(jnp.int32)               # nonzero tiles first, in order
    last_valid = jnp.take_along_axis(order, jnp.maximum(kcnt - 1, 0)[:, None], axis=1)
    jpos = jnp.arange(nk, dtype=jnp.int32)[None, :]
    kidx_full = jnp.where(jpos < kcnt[:, None], order, last_valid)
    kidx = kidx_full[:, :max_k].reshape(-1)                          # flat 1-D -> cheap SMEM layout
    nnz_tiles = int(jnp.sum(kcnt))
    return kidx, kcnt, max_k, nnz_tiles


# ----------------------------------------------------------------------------
# Fused per-layer kernel: H = epilogue( A_hat @ (X @ W') )
# ----------------------------------------------------------------------------
def _fused_gcn_kernel(kidx_ref, kcnt_ref, a_ref, x_ref, w_ref, shift_ref,
                      o_ref, acc_ref, *, apply_relu):
    i = pl.program_id(0)
    j = pl.program_id(1)

    @pl.when(j == 0)
    def _init():
        acc_ref[...] = jnp.zeros_like(acc_ref)

    @pl.when(j < kcnt_ref[i])                     # skip empty A tiles entirely
    def _accumulate():
        xw = jnp.dot(x_ref[...], w_ref[...],
                     preferred_element_type=jnp.float32).astype(jnp.bfloat16)
        acc_ref[...] += jnp.dot(a_ref[...], xw,
                                preferred_element_type=jnp.float32)

    @pl.when(j == pl.num_programs(1) - 1)
    def _epilogue():
        h = acc_ref[...] + shift_ref[...]         # conv bias + eval-BN shift (scale folded into W)
        if apply_relu:
            h = jnp.maximum(h, 0.0)
        o_ref[...] = h.astype(o_ref.dtype)


def _gcn_layer(a_pad, kidx, kcnt, max_k, nnz_tiles, h, w_pad, shift_pad,
               *, apply_relu, out_dtype, tm, tk, vmem_limit):
    n_pad = a_pad.shape[0]
    f_in_pad, f_out_pad = w_pad.shape
    out_itemsize = jnp.dtype(out_dtype).itemsize
    kernel = functools.partial(_fused_gcn_kernel, apply_relu=apply_relu)

    return pl.pallas_call(
        kernel,
        out_shape=jax.ShapeDtypeStruct((n_pad, f_out_pad), out_dtype),
        grid_spec=pltpu.PrefetchScalarGridSpec(
            num_scalar_prefetch=2,
            grid=(n_pad // tm, max_k),
            in_specs=[
                # A_hat (i, data-dependent k) tile, bf16 streamed from HBM
                pl.BlockSpec((tm, tk),
                             lambda i, j, kidx_r, kcnt_r: (i, kidx_r[i * max_k + j])),
                # X k-tile (same data-dependent k index)
                pl.BlockSpec((tk, f_in_pad),
                             lambda i, j, kidx_r, kcnt_r: (kidx_r[i * max_k + j], 0)),
                # W' (BN scale folded in), resident
                pl.BlockSpec((f_in_pad, f_out_pad),
                             lambda i, j, kidx_r, kcnt_r: (0, 0)),
                # shift (bias + BN shift), resident
                pl.BlockSpec((1, f_out_pad),
                             lambda i, j, kidx_r, kcnt_r: (0, 0)),
            ],
            out_specs=pl.BlockSpec((tm, f_out_pad),
                                   lambda i, j, kidx_r, kcnt_r: (i, 0)),
            scratch_shapes=[pltpu.VMEM((tm, f_out_pad), jnp.float32)],
        ),
        compiler_params=pltpu.CompilerParams(
            dimension_semantics=("parallel", "arbitrary"),
            vmem_limit_bytes=vmem_limit,
        ),
        cost_estimate=pl.CostEstimate(
            flops=int(2 * nnz_tiles * tm * tk * f_out_pad
                      + 2 * nnz_tiles * tk * f_in_pad * f_out_pad),
            transcendentals=0,
            bytes_accessed=int(nnz_tiles * tm * tk * 2
                               + nnz_tiles * tk * f_in_pad * 2
                               + f_in_pad * f_out_pad * 2
                               + n_pad * f_out_pad * out_itemsize),
        ),
    )(kidx, kcnt, a_pad, h, w_pad, shift_pad)


# ----------------------------------------------------------------------------
# Glue: normalized adjacency (GCNConv semantics, built directly in bf16) and params
# ----------------------------------------------------------------------------
def build_normalized_adjacency(edge_index, num_nodes, n_pad):
    """Dense D^{-1/2}(A+I)D^{-1/2}, padded to (n_pad, n_pad), stored bf16.
    Degrees come from a scatter-add over edges; no f32 NxN intermediate."""
    src = edge_index[0]
    dst = edge_index[1]
    deg = jnp.zeros((num_nodes,), jnp.float32).at[dst].add(1.0) + 1.0   # + self loop
    d_inv_sqrt = 1.0 / jnp.sqrt(jnp.maximum(deg, 1e-12))
    w_edge = (d_inv_sqrt[dst] * d_inv_sqrt[src]).astype(jnp.bfloat16)
    a = jnp.zeros((n_pad, n_pad), jnp.bfloat16)
    a = a.at[dst, src].add(w_edge)                                      # message flows src -> dst
    diag = jnp.arange(num_nodes)
    a = a.at[diag, diag].add((d_inv_sqrt * d_inv_sqrt).astype(jnp.bfloat16))
    return a


def glorot(key, shape):
    fan_in, fan_out = shape
    limit = jnp.sqrt(6.0 / (fan_in + fan_out))
    return jax.random.uniform(key, shape, jnp.float32, -limit, limit)


def init_gcn_model(key, in_feats, hidden_feats, out_feats, num_layers=2):
    """Deterministic parameter init mirroring GCNModel.__init__."""
    dims = [in_feats] + [hidden_feats] * (num_layers - 1) + [out_feats]
    params = []
    for li in range(num_layers):
        key, wk = jax.random.split(key)
        f_in, f_out = dims[li], dims[li + 1]
        w = glorot(wk, (f_in, f_out))          # GCNConv weight (glorot)
        b = jnp.zeros((f_out,), jnp.float32)   # GCNConv bias (zeros)
        if li < num_layers - 1:
            gamma = jnp.ones((f_out,), jnp.float32)
            beta = jnp.zeros((f_out,), jnp.float32)
            rmean = jnp.zeros((f_out,), jnp.float32)
            rvar = jnp.ones((f_out,), jnp.float32)
        else:
            gamma = beta = rmean = rvar = None
        params.append(dict(w=w, b=b, gamma=gamma, beta=beta, rmean=rmean, rvar=rvar))
    return params


def gcn_model_forward(params, x, edge_index, eps=1e-5):
    """Forward pass of GCNModel (eval mode)."""
    num_nodes, in_feats = x.shape
    n_pad = _round_up(max(num_nodes, 8), _LANE)
    vmem_limit = _vmem_limit_bytes()

    a_pad = build_normalized_adjacency(edge_index, num_nodes, n_pad)

    n_layers = len(params)
    out_feats = params[-1]["w"].shape[1]
    dims = [in_feats] + [p["w"].shape[1] for p in params]
    f_pad_max = max(_round_up(d, _LANE) for d in dims)

    tm, tk = _select_tiles(n_pad, f_pad_max, 4, vmem_limit)
    kidx, kcnt, max_k, nnz_tiles = _tile_sparsity_map(a_pad, tm, tk)

    f_in_pad0 = _round_up(in_feats, _LANE)
    h = _pad2d(x.astype(jnp.float32), n_pad, f_in_pad0).astype(jnp.bfloat16)

    for li, p in enumerate(params):
        f_in, f_out = p["w"].shape
        f_in_pad = _round_up(f_in, _LANE)
        f_out_pad = _round_up(f_out, _LANE)

        if li < n_layers - 1:
            # fold conv bias + eval-mode BN into the weight columns / a per-feature shift
            s = p["gamma"] / jnp.sqrt(p["rvar"] + eps)
            t = p["beta"] - p["rmean"] * s
            w_eff = p["w"] * s[None, :]
            shift = (p["b"] * s + t).reshape(1, f_out)
            apply_relu = True
            out_dtype = jnp.bfloat16
        else:
            w_eff = p["w"]
            shift = p["b"].reshape(1, f_out)
            apply_relu = False
            out_dtype = jnp.float32

        w_pad = _pad2d(w_eff, f_in_pad, f_out_pad).astype(jnp.bfloat16)
        shift_pad = _pad2d(shift, 1, f_out_pad).astype(jnp.float32)

        # NOTE: padded rows (nodes >= num_nodes) end up holding relu(shift); harmless because
        # the corresponding padded A columns are zero and they are sliced off below.
        h = _gcn_layer(a_pad, kidx, kcnt, max_k, nnz_tiles, h, w_pad, shift_pad,
                       apply_relu=apply_relu, out_dtype=out_dtype,
                       tm=tm, tk=tk, vmem_limit=vmem_limit)
        # dropout(training=False) == identity

    return h[:num_nodes, :out_feats]


# ----------------------------------------------------------------------------
# Main
# ----------------------------------------------------------------------------
if __name__ == "__main__":
    key = jax.random.PRNGKey(0)

    num_nodes = 32
    in_feats = 16
    hidden_feats = 32
    out_feats = 8
    num_layers = 2
    num_edges = 64

    key, kx, ke, kp = jax.random.split(key, 4)
    x = jax.random.normal(kx, (num_nodes, in_feats), jnp.float32)
    edge_index = jax.random.randint(ke, (2, num_edges), 0, num_nodes, jnp.int32)

    params = init_gcn_model(kp, in_feats, hidden_feats, out_feats, num_layers)

    out = gcn_model_forward(params, x, edge_index)
    out = jax.block_until_ready(out)

    assert out.shape == (num_nodes, out_feats), out.shape
    assert bool(jnp.all(jnp.isfinite(out)))
    print("KERNEL_OK")
</pallas_src>

<mosaic_0001>
module attributes {stable_mosaic.version = 11 : i64} {
  func.func @_fused_gcn_kernel(%arg0: i32, %arg1: i32, %arg2: memref<2xi32, #tpu.memory_space<smem>>, %arg3: memref<2xi32, #tpu.memory_space<smem>>, %arg4: memref<64x128xbf16, #tpu.memory_space<vmem>>, %arg5: memref<128x128xbf16, #tpu.memory_space<vmem>>, %arg6: memref<128x128xbf16, #tpu.memory_space<vmem>>, %arg7: memref<1x128xf32, #tpu.memory_space<vmem>>, %arg8: memref<64x128xbf16, #tpu.memory_space<vmem>>, %arg9: memref<64x128xf32, #tpu.memory_space<vmem>>) attributes {dimension_semantics = [#tpu.dimension_semantics<parallel>, #tpu.dimension_semantics<arbitrary>], iteration_bounds = array<i64: 2, 1>, scalar_prefetch = 2 : i64, scratch_operands = 1 : i64, tpu.core_type = #tpu.core_type<tc>, window_params = [{transform_indices = @transform_0, window_bounds = array<i64: 64, 128>}, {transform_indices = @transform_1, window_bounds = array<i64: 128, 128>}, {pipeline_mode = #tpu.pipeline_mode<synchronous>, transform_indices = @transform_2, window_bounds = array<i64: 128, 128>}, {pipeline_mode = #tpu.pipeline_mode<synchronous>, transform_indices = @transform_3, window_bounds = array<i64: 1, 128>}, {transform_indices = @transform_4, window_bounds = array<i64: 64, 128>}]} {
    %c0_i32 = arith.constant 0 : i32
    %0 = arith.cmpi eq, %arg1, %c0_i32 : i32
    %1 = arith.extui %0 : i1 to i32
    %c0_i32_0 = arith.constant 0 : i32
    %2 = arith.cmpi ne, %1, %c0_i32_0 : i32
    scf.if %2 {
      %cst = arith.constant 0.000000e+00 : f32
      %11 = vector.broadcast %cst : f32 to vector<64x128xf32>
      %c0 = arith.constant 0 : index
      %c0_4 = arith.constant 0 : index
      %12 = vector.load %arg9[%c0, %c0_4] : memref<64x128xf32, #tpu.memory_space<vmem>>, vector<64x128xf32>
      tpu.vector_store %arg9[%c0, %c0_4], %11 {strides = array<i32>} : memref<64x128xf32, #tpu.memory_space<vmem>>, vector<64x128xf32>,
    } else {
    }
    %3 = arith.index_cast %arg0 : i32 to index
    %4 = memref.load %arg3[%3] : memref<2xi32, #tpu.memory_space<smem>>
    %5 = arith.cmpi slt, %arg1, %4 : i32
    %6 = arith.extui %5 : i1 to i32
    %c0_i32_1 = arith.constant 0 : i32
    %7 = arith.cmpi ne, %6, %c0_i32_1 : i32
    scf.if %7 {
      %c0 = arith.constant 0 : index
      %c0_4 = arith.constant 0 : index
      %11 = vector.load %arg5[%c0, %c0_4] : memref<128x128xbf16, #tpu.memory_space<vmem>>, vector<128x128xbf16>
      %c0_5 = arith.constant 0 : index
      %c0_6 = arith.constant 0 : index
      %12 = vector.load %arg6[%c0_5, %c0_6] : memref<128x128xbf16, #tpu.memory_space<vmem>>, vector<128x128xbf16>
      %cst = arith.constant dense<0.000000e+00> : vector<128x128xf32>
      %13 = tpu.matmul %11, %12, %cst {dimension_numbers = #tpu.dot_dimension_numbers<[1], [0], [0], [1], [0, 0, 1, 1], [], []>} : vector<128x128xbf16>, vector<128x128xbf16>, vector<128x128xf32> -> vector<128x128xf32>
      %14 = arith.truncf %13 : vector<128x128xf32> to vector<128x128xbf16>
      %c0_7 = arith.constant 0 : index
      %c0_8 = arith.constant 0 : index
      %15 = vector.load %arg9[%c0_7, %c0_8] : memref<64x128xf32, #tpu.memory_space<vmem>>, vector<64x128xf32>
      %c0_9 = arith.constant 0 : index
      %c0_10 = arith.constant 0 : index
      %16 = vector.load %arg4[%c0_9, %c0_10] : memref<64x128xbf16, #tpu.memory_space<vmem>>, vector<64x128xbf16>
      %cst_11 = arith.constant dense<0.000000e+00> : vector<64x128xf32>
      %17 = tpu.matmul %16, %14, %cst_11 {dimension_numbers = #tpu.dot_dimension_numbers<[1], [0], [0], [1], [0, 0, 1, 1], [], []>} : vector<64x128xbf16>, vector<128x128xbf16>, vector<64x128xf32> -> vector<64x128xf32>
      %18 = arith.addf %15, %17 : vector<64x128xf32>
      %c0_12 = arith.constant 0 : index
      %c0_13 = arith.constant 0 : index
      %19 = vector.load %arg9[%c0_12, %c0_13] : memref<64x128xf32, #tpu.memory_space<vmem>>, vector<64x128xf32>
      tpu.vector_store %arg9[%c0_12, %c0_13], %18 {strides = array<i32>} : memref<64x128xf32, #tpu.memory_space<vmem>>, vector<64x128xf32>,
    } else {
    }
    %c0_i32_2 = arith.constant 0 : i32
    %8 = arith.cmpi eq, %arg1, %c0_i32_2 : i32
    %9 = arith.extui %8 : i1 to i32
    %c0_i32_3 = arith.constant 0 : i32
    %10 = arith.cmpi ne, %9, %c0_i32_3 : i32
    scf.if %10 {
      %c0 = arith.constant 0 : index
      %c0_4 = arith.constant 0 : index
      %11 = vector.load %arg9[%c0, %c0_4] : memref<64x128xf32, #tpu.memory_space<vmem>>, vector<64x128xf32>
      %c0_5 = arith.constant 0 : index
      %c0_6 = arith.constant 0 : index
      %12 = vector.load %arg7[%c0_5, %c0_6] : memref<1x128xf32, #tpu.memory_space<vmem>>, vector<1x128xf32>
      %13 = vector.broadcast %12 : vector<1x128xf32> to vector<64x128xf32>
      %14 = arith.addf %11, %13 : vector<64x128xf32>
      %cst = arith.constant 0.000000e+00 : f32
      %15 = vector.broadcast %cst : f32 to vector<64x128xf32>
      %16 = arith.maximumf %14, %15 : vector<64x128xf32>
      %17 = arith.truncf %16 : vector<64x128xf32> to vector<64x128xbf16>
      %c0_7 = arith.constant 0 : index
      %c0_8 = arith.constant 0 : index
      %18 = vector.load %arg8[%c0_7, %c0_8] : memref<64x128xbf16, #tpu.memory_space<vmem>>, vector<64x128xbf16>
      tpu.vector_store %arg8[%c0_7, %c0_8], %17 {strides = array<i32>} : memref<64x128xbf16, #tpu.memory_space<vmem>>, vector<64x128xbf16>,
    } else {
    }
    return
  }
  func.func @transform_0(%arg0: i32, %arg1: i32, %arg2: memref<2xi32, #tpu.memory_space<smem>>, %arg3: memref<2xi32, #tpu.memory_space<smem>>) -> (i32, i32) {
    %c1_i32 = arith.constant 1 : i32
    %0 = arith.muli %arg0, %c1_i32 : i32
    %1 = arith.addi %0, %arg1 : i32
    %2 = arith.index_cast %1 : i32 to index
    %3 = memref.load %arg2[%2] : memref<2xi32, #tpu.memory_space<smem>>
    %c0_i32 = arith.constant 0 : i32
    return %arg0, %3 : i32, i32
  }
  func.func @transform_1(%arg0: i32, %arg1: i32, %arg2: memref<2xi32, #tpu.memory_space<smem>>, %arg3: memref<2xi32, #tpu.memory_space<smem>>) -> (i32, i32) {
    %c1_i32 = arith.constant 1 : i32
    %0 = arith.muli %arg0, %c1_i32 : i32
    %1 = arith.addi %0, %arg1 : i32
    %2 = arith.index_cast %1 : i32 to index
    %3 = memref.load %arg2[%2] : memref<2xi32, #tpu.memory_space<smem>>
    %c0_i32 = arith.constant 0 : i32
    %c0_i32_0 = arith.constant 0 : i32
    return %3, %c0_i32 : i32, i32
  }
  func.func @transform_2(%arg0: i32, %arg1: i32, %arg2: memref<2xi32, #tpu.memory_space<smem>>, %arg3: memref<2xi32, #tpu.memory_space<smem>>) -> (i32, i32) {
    %c0_i32 = arith.constant 0 : i32
    %c0_i32_0 = arith.constant 0 : i32
    %c0_i32_1 = arith.constant 0 : i32
    return %c0_i32, %c0_i32_0 : i32, i32
  }
  func.func @transform_3(%arg0: i32, %arg1: i32, %arg2: memref<2xi32, #tpu.memory_space<smem>>, %arg3: memref<2xi32, #tpu.memory_space<smem>>) -> (i32, i32) {
    %c0_i32 = arith.constant 0 : i32
    %c0_i32_0 = arith.constant 0 : i32
    %c0_i32_1 = arith.constant 0 : i32
    return %c0_i32, %c0_i32_0 : i32, i32
  }
  func.func @transform_4(%arg0: i32, %arg1: i32, %arg2: memref<2xi32, #tpu.memory_space<smem>>, %arg3: memref<2xi32, #tpu.memory_space<smem>>) -> (i32, i32) {
    %c0_i32 = arith.constant 0 : i32
    %c0_i32_0 = arith.constant 0 : i32
    return %arg0, %c0_i32 : i32, i32
  }
}

</mosaic_0001>

<llo_original>
// kernel: tpu_custom_call.1
$region0: #{tpu_custom_call.1}
  #allocation0 [shape = 'u32[]', space=smem, size = 0x4, offset = 0x4, fixed_abs, tag = 'smem constant byte address 0x4 - core index']
  #allocation1 [shape = 'u32[144,128]{1,0:T(1,128)}', space=vmem, size = 0x12000, scoped, tag = 'internal scratch']
  #allocation2 [shape = 'f32[64,128]{1,0:T(8,128)}', space=vmem, size = 0x8000, scoped, tag = 'scratch operand']
  #allocation3 [shape = 's32[1]{0}', space=sflag, size = 0x4, scoped, tag = 'scoped memory for tpu_custom_call.1']
  #allocation4 [shape = 'u8[512]{0}', space=smem, size = 0x200, scoped, tag = 'prefetched SMEM operand 0']
  #allocation5 [shape = 'u8[512]{0}', space=smem, size = 0x200, scoped, tag = 'prefetched SMEM operand 1']
  %s0 = inlined_call_operand.hbm [shape: s32[2], index: 0, kind: input, shape index: {}]
  %s1 = inlined_call_operand.hbm [shape: s32[2], index: 1, kind: input, shape index: {}]
  %s2 = inlined_call_operand.hbm [shape: bf16[128,128], index: 2, kind: input, shape index: {}]
  %s3 = inlined_call_operand.hbm [shape: bf16[128,128], index: 3, kind: input, shape index: {}]
  %s4 = inlined_call_operand.hbm [shape: bf16[128,128], index: 4, kind: input, shape index: {}]
  %s5 = inlined_call_operand.hbm [shape: f32[1,128], index: 5, kind: input, shape index: {}]
  %s6 = inlined_call_operand.hbm [shape: bf16[128,128], index: 6, kind: output, shape index: {}]
  %s7 = sld [smem:[#allocation0]]
  $region77: #{tpu_custom_call.1} parent=0
    _
  %s9 = ssub.s32 1, %s7
  %s10 = scalar_select 0, %s9, %s7
  %12 = dma.hbm_to_smem %s0, 16, [#allocation4], [#allocation3]
  %14 = dma.hbm_to_smem %s1, 16, [#allocation5], [#allocation3]
  %15 = dma.done [#allocation3], 32
  %16 = sfence
  $region1: #{tpu_custom_call.1} parent=0
    #allocation6 [shape = 'u8[32768]{0}', space=vmem, size = 0x8000, scoped, tag = 'input window, operand 2']
    #allocation7 [shape = 's32[2]{0}', space=sflag, size = 0x8, scoped, tag = 'scoped memory for tpu_custom_call.1']
    #allocation8 [shape = 's32[2]{0}', space=sflag, size = 0x8, scoped, tag = 'scoped memory for tpu_custom_call.1']
    #allocation9 [shape = 'u8[65536]{0}', space=vmem, size = 0x10000, scoped, tag = 'input window, operand 3']
    #allocation10 [shape = 's32[2]{0}', space=sflag, size = 0x8, scoped, tag = 'scoped memory for tpu_custom_call.1']
    #allocation11 [shape = 'u8[32768]{0}', space=vmem, size = 0x8000, scoped, tag = 'input window, operand 4, single buffered']
    #allocation12 [shape = 'u8[512]{0}', space=vmem, size = 0x400, scoped, tag = 'input window, operand 5, single buffered']
    #allocation13 [shape = 's32[1]{0}', space=sflag, size = 0x4, scoped, tag = 'scoped memory for tpu_custom_call.1']
    #allocation14 [shape = 'u8[32768]{0}', space=vmem, size = 0x8000, scoped, tag = 'output window, operand 0']
    %17 = vsyncpa [#allocation7], 0
    %s18 = scalar_lea.sflag [#allocation7], 1
    %19 = vsyncpa %s18, 0
    %20 = vsyncpa [#allocation10], 0
    %s21 = scalar_lea.sflag [#allocation10], 1
    %22 = vsyncpa %s21, 0
    %23 = vsyncpa [#allocation13], 0
    %24 = vsyncpa [#allocation8], 0
    %s25 = scalar_lea.sflag [#allocation8], 1
    %26 = vsyncpa %s25, 0
    loop: start=0, step=1, limit=4
    $region2: #{tpu_custom_call.1} parent=1 // loop_pre_header
      _
    $region3: #{tpu_custom_call.1} parent=1 // loop_header
      %s28 = sphi 0, %s32
      %p29 = scmp.ge.s32.totalorder %s28, 4
      %s35 = sphi 0, %s47
      %s36 = sphi 0, %s43
      %s37 = sphi 0, %s35
      %s38 = sphi 0, %s36
      %s39 = sphi 0, %s37
      %s40 = sphi 0, %s38
      %s56 = sphi 0, %s58
      %s59 = sphi 0, %s56
      %s60 = sphi 0, %s59
      %s76 = sphi 0, %s60
      %s86 = sphi 0, %s88
      %s89 = sphi 0, %s86
      %s90 = sphi 0, %s89
      %s106 = sphi 0, %s90
      %s110 = sphi 0, %s110
      %s112 = sphi 0, %s110
      %s113 = sphi 0, %s112
      %s127 = sphi 0, %s113
      %s131 = sphi 0, %s131
      %s133 = sphi 0, %s131
      %s134 = sphi 0, %s133
      %s148 = sphi 0, %s134
      %s154 = sphi 0, %s156
      %s157 = sphi 0, %s154
      %s158 = sphi 0, %s157
      %s174 = sphi 0, %s158
    $region4: #{tpu_custom_call.1} parent=1 // loop_header_branch
      %31 = sbr.rel (%p29) target = $region8
    $region5: #{tpu_custom_call.1} parent=1 // loop_body
      %s33 = ssub.s32 %s28, 1
      %s34 = ssub.s32 %s28, 2
      %s41 = sadd.s32 1, %s36
      %p42 = scmp.ge.s32.totalorder %s41, 1
      %s43 = scalar_select %p42, 0, %s41
      %s44 = sadd.s32 1, %s35
      %s45 = scalar_select %p42, %s44, %s35
      %p46 = scmp.ge.s32.totalorder %s45, 2
      %s47 = scalar_select %p46, 0, %s45
      %s48 = sadd.s32 %s35, %s36
      %s49 = sld [smem:[#allocation4 + %s48]]
      %s50 = sadd.s32 %s47, %s43
      %s51 = sld [smem:[#allocation4 + %s50]]
      %s52 = ssub.s32 %s35, %s47
      %s53 = ssub.s32 %s49, %s51
      %s54 = sor.u32 %s52, %s53
      %p55 = scmp.eq.s32.totalorder %s54, 0
      %s57 = sadd.s32 %s56, 1
      %s58 = scalar_select %p55, %s56, %s57
      %p61 = pneg %p55
      %p62 = scmp.eq.s32.totalorder %s28, 1
      %p63 = por %p61, %p62
      %p64 = scmp.ne.s32.totalorder %s56, %s59
      %p65 = scmp.eq.s32.totalorder %s28, 0
      %p66 = por %p64, %p65
      %p67 = scmp.ne.s32.totalorder %s56, %s59
      %p68 = scmp.eq.s32.totalorder %s33, 1
      %p69 = por %p67, %p68
      %p70 = scmp.ne.s32.totalorder %s59, %s60
      %p71 = scmp.eq.s32.totalorder %s33, 0
      %p72 = por %p70, %p71
      %p73 = scmp.ne.s32.totalorder %s59, %s60
      %p74 = scmp.eq.s32.totalorder %s34, 1
      %p75 = por %p73, %p74
      %p77 = scmp.ne.s32.totalorder %s60, %s76
      %p78 = scmp.eq.s32.totalorder %s34, 0
      %p79 = por %p77, %p78
      %s80 = sadd.s32 %s35, %s36
      %s81 = sld [smem:[#allocation4 + %s80]]
      %s82 = sadd.s32 %s47, %s43
      %s83 = sld [smem:[#allocation4 + %s82]]
      %s84 = ssub.s32 %s81, %s83
      %p85 = scmp.eq.s32.totalorder %s84, 0
      %s87 = sadd.s32 %s86, 1
      %s88 = scalar_select %p85, %s86, %s87
      %p91 = pneg %p85
      %p92 = scmp.eq.s32.totalorder %s28, 1
      %p93 = por %p91, %p92
      %p94 = scmp.ne.s32.totalorder %s86, %s89
      %p95 = scmp.eq.s32.totalorder %s28, 0
      %p96 = por %p94, %p95
      %p97 = scmp.ne.s32.totalorder %s86, %s89
      %p98 = scmp.eq.s32.totalorder %s33, 1
      %p99 = por %p97, %p98
      %p100 = scmp.ne.s32.totalorder %s89, %s90
      %p101 = scmp.eq.s32.totalorder %s33, 0
      %p102 = por %p100, %p101
      %p103 = scmp.ne.s32.totalorder %s89, %s90
      %p104 = scmp.eq.s32.totalorder %s34, 1
      %p105 = por %p103, %p104
      %p107 = scmp.ne.s32.totalorder %s90, %s106
      %p108 = scmp.eq.s32.totalorder %s34, 0
      %p109 = por %p107, %p108
      %s111 = sadd.s32 %s110, 1
      %p114 = scmp.eq.s32.totalorder %s28, 1
      %p115 = scmp.ne.s32.totalorder %s110, %s112
      %p116 = scmp.eq.s32.totalorder %s28, 0
      %p117 = por %p115, %p116
      %p118 = scmp.ne.s32.totalorder %s110, %s112
      %p119 = scmp.eq.s32.totalorder %s33, 1
      %p120 = por %p118, %p119
      %p121 = scmp.ne.s32.totalorder %s112, %s113
      %p122 = scmp.eq.s32.totalorder %s33, 0
      %p123 = por %p121, %p122
      %p124 = scmp.ne.s32.totalorder %s112, %s113
      %p125 = scmp.eq.s32.totalorder %s34, 1
      %p126 = por %p124, %p125
      %p128 = scmp.ne.s32.totalorder %s113, %s127
      %p129 = scmp.eq.s32.totalorder %s34, 0
      %p130 = por %p128, %p129
      %s132 = sadd.s32 %s131, 1
      %p135 = scmp.eq.s32.totalorder %s28, 1
      %p136 = scmp.ne.s32.totalorder %s131, %s133
      %p137 = scmp.eq.s32.totalorder %s28, 0
      %p138 = por %p136, %p137
      %p139 = scmp.ne.s32.totalorder %s131, %s133
      %p140 = scmp.eq.s32.totalorder %s33, 1
      %p141 = por %p139, %p140
      %p142 = scmp.ne.s32.totalorder %s133, %s134
      %p143 = scmp.eq.s32.totalorder %s33, 0
      %p144 = por %p142, %p143
      %p145 = scmp.ne.s32.totalorder %s133, %s134
      %p146 = scmp.eq.s32.totalorder %s34, 1
      %p147 = por %p145, %p146
      %p149 = scmp.ne.s32.totalorder %s134, %s148
      %p150 = scmp.eq.s32.totalorder %s34, 0
      %p151 = por %p149, %p150
      %s152 = ssub.s32 %s35, %s47
      %p153 = scmp.eq.s32.totalorder %s152, 0
      %s155 = sadd.s32 %s154, 1
      %s156 = scalar_select %p153, %s154, %s155
      %p159 = pneg %p153
      %p160 = scmp.eq.s32.totalorder %s28, 1
      %p161 = por %p159, %p160
      %p162 = scmp.ne.s32.totalorder %s154, %s157
      %p163 = scmp.eq.s32.totalorder %s28, 0
      %p164 = por %p162, %p163
      %p165 = scmp.ne.s32.totalorder %s154, %s157
      %p166 = scmp.eq.s32.totalorder %s33, 1
      %p167 = por %p165, %p166
      %p168 = scmp.ne.s32.totalorder %s157, %s158
      %p169 = scmp.eq.s32.totalorder %s33, 0
      %p170 = por %p168, %p169
      %p171 = scmp.ne.s32.totalorder %s157, %s158
      %p172 = scmp.eq.s32.totalorder %s34, 1
      %p173 = por %p171, %p172
      %p175 = scmp.ne.s32.totalorder %s158, %s174
      %p176 = scmp.eq.s32.totalorder %s34, 0
      %p177 = por %p175, %p176
      %p178 = scmp.le.s32.totalorder 1, %s28
      %p179 = scmp.lt.s32.totalorder %s28, 3
      %p180 = pnand %p178, %p179
      %p181 = pneg %p180
      // Predicated region
      $region9: #{tpu_custom_call.1} parent=5 // pred_check
        _
      $region10: #{tpu_custom_call.1} parent=5 // pred_check_branch
        %183 = sbr.rel (%p180) target = $region12
      $region11: #{tpu_custom_call.1} parent=5 // pred_region
        %s184 = ssub.s32 %s28, 1
        // Predicated region
        $region13: #{tpu_custom_call.1} parent=11 // pred_check
          %p185 = pneg %p123
        $region14: #{tpu_custom_call.1} parent=11 // pred_check_branch
          %187 = sbr.rel (%p185) target = $region16
        $region15: #{tpu_custom_call.1} parent=11 // pred_region
          %s189 = ssub.s32 1024, 1024
          %190 = vsyncadd [#allocation10], %s189
          %s191 = sshll.u32 [#allocation11], 4
          %s192 = int_to_ptr.vmem [resolvable:$true] %s191
          %197 = dma.hbm_to_vmem [thread:$0]  %s4, 1024, %s192, [#allocation10], 64, 64, 4
        $region16: #{tpu_custom_call.1} parent=11 // pred_fallthru
          _
        // Predicated region
        $region17: #{tpu_custom_call.1} parent=11 // pred_check
          %p198 = pneg %p144
        $region18: #{tpu_custom_call.1} parent=11 // pred_check_branch
          %200 = sbr.rel (%p198) target = $region20
        $region19: #{tpu_custom_call.1} parent=11 // pred_region
          %s202 = ssub.s32 16, 16
          %203 = vsyncadd [#allocation13], %s202
          %s205 = sshll.u32 [#allocation12], 4
          %s206 = int_to_ptr.vmem [resolvable:$true] %s205
          %208 = dma.hbm_to_vmem [thread:$0]  %s5, 16, %s206, [#allocation13]
        $region20: #{tpu_custom_call.1} parent=11 // pred_fallthru
          _
      $region12: #{tpu_custom_call.1} parent=5 // pred_fallthru
        _
      %p209 = scmp.lt.s32.totalorder %s28, 2
      // Predicated region
      $region21: #{tpu_custom_call.1} parent=5 // pred_check
        %p210 = pneg %p209
      $region22: #{tpu_custom_call.1} parent=5 // pred_check_branch
        %212 = sbr.rel (%p210) target = $region24
      $region23: #{tpu_custom_call.1} parent=5 // pred_region
        // Predicated region
        $region25: #{tpu_custom_call.1} parent=23 // pred_check
          %p213 = pneg %p66
        $region26: #{tpu_custom_call.1} parent=23 // pred_check_branch
          %215 = sbr.rel (%p213) target = $region28
        $region27: #{tpu_custom_call.1} parent=23 // pred_region
          %s216 = sand.u32 %s56, 1
          %s217 = scalar_lea.sflag [#allocation7], %s216
          %s218 = sand.u32 %s56, 1
          %s219 = smul.addr %s218, 32
          %s220 = scalar_lea.vmem [#allocation6], %s219
          %s221 = sadd.s32 %s35, %s36
          %s222 = sld [smem:[#allocation4 + %s221]]
          %s223 = smul.u32 8, %s35
          %s225 = ssub.s32 512, 512
          %226 = vsyncadd %s217, %s225
          %s227 = sadd.s32 %s222, %s223
          %s228 = smul.addr %s227, 64
          %s229 = scalar_lea.hbm %s2, %s228
          %s230 = sshll.u32 %s220, 4
          %s231 = int_to_ptr.vmem [resolvable:$true] %s230
          %236 = dma.hbm_to_vmem [thread:$0]  %s229, 512, %s231, %s217, 64, 64, 4
        $region28: #{tpu_custom_call.1} parent=23 // pred_fallthru
          _
        // Predicated region
        $region29: #{tpu_custom_call.1} parent=23 // pred_check
          %p237 = pneg %p96
        $region30: #{tpu_custom_call.1} parent=23 // pred_check_branch
          %239 = sbr.rel (%p237) target = $region32
        $region31: #{tpu_custom_call.1} parent=23 // pred_region
          %s240 = sand.u32 %s28, 1
          %s241 = scalar_lea.sflag [#allocation10], %s240
          %s242 = sand.u32 %s86, 1
          %s243 = smul.addr %s242, 64
          %s244 = scalar_lea.vmem [#allocation9], %s243
          %s245 = sadd.s32 %s35, %s36
          %s246 = sld [smem:[#allocation4 + %s245]]
          %s247 = smul.u32 16, %s246
          %s249 = ssub.s32 1024, 1024
          %250 = vsyncadd %s241, %s249
          %s251 = smul.addr %s247, 64
          %s252 = scalar_lea.hbm %s3, %s251
          %s253 = sshll.u32 %s244, 4
          %s254 = int_to_ptr.vmem [resolvable:$true] %s253
          %259 = dma.hbm_to_vmem [thread:$0]  %s252, 1024, %s254, %s241, 64, 64, 4
        $region32: #{tpu_custom_call.1} parent=23 // pred_fallthru
          _
      $region24: #{tpu_custom_call.1} parent=5 // pred_fallthru
        _
      %p260 = scmp.le.s32.totalorder 1, %s28
      %p261 = scmp.lt.s32.totalorder %s28, 3
      %p262 = pnand %p260, %p261
      %p263 = pneg %p262
      // Predicated region
      $region33: #{tpu_custom_call.1} parent=5 // pred_check
        _
      $region34: #{tpu_custom_call.1} parent=5 // pred_check_branch
        %265 = sbr.rel (%p262) target = $region36
      $region35: #{tpu_custom_call.1} parent=5 // pred_region
        %s266 = ssub.s32 %s28, 1
        %s267 = sand.u32 %s59, 1
        %s268 = scalar_lea.sflag [#allocation7], %s267
        %s269 = sand.u32 %s59, 1
        %s270 = smul.addr %s269, 32
        %s271 = scalar_lea.vmem [#allocation6], %s270
        // Predicated region
        $region37: #{tpu_custom_call.1} parent=35 // pred_check
          %p272 = pneg %p72
        $region38: #{tpu_custom_call.1} parent=35 // pred_check_branch
          %274 = sbr.rel (%p272) target = $region40
        $region39: #{tpu_custom_call.1} parent=35 // pred_region
          %275 = dma.done %s268, 512
        $region40: #{tpu_custom_call.1} parent=35 // pred_fallthru
          _
        %s276 = sand.u32 %s33, 1
        %s277 = scalar_lea.sflag [#allocation10], %s276
        %s278 = sand.u32 %s89, 1
        %s279 = smul.addr %s278, 64
        %s280 = scalar_lea.vmem [#allocation9], %s279
        // Predicated region
        $region41: #{tpu_custom_call.1} parent=35 // pred_check
          %p281 = pneg %p102
        $region42: #{tpu_custom_call.1} parent=35 // pred_check_branch
          %283 = sbr.rel (%p281) target = $region44
        $region43: #{tpu_custom_call.1} parent=35 // pred_region
          %284 = dma.done %s277, 1024
        $region44: #{tpu_custom_call.1} parent=35 // pred_fallthru
          _
        // Predicated region
        $region45: #{tpu_custom_call.1} parent=35 // pred_check
          %p285 = pneg %p123
        $region46: #{tpu_custom_call.1} parent=35 // pred_check_branch
          %287 = sbr.rel (%p285) target = $region48
        $region47: #{tpu_custom_call.1} parent=35 // pred_region
          %288 = dma.done [#allocation10], 1024
        $region48: #{tpu_custom_call.1} parent=35 // pred_fallthru
          _
        // Predicated region
        $region49: #{tpu_custom_call.1} parent=35 // pred_check
          %p289 = pneg %p144
        $region50: #{tpu_custom_call.1} parent=35 // pred_check_branch
          %291 = sbr.rel (%p289) target = $region52
        $region51: #{tpu_custom_call.1} parent=35 // pred_region
          %292 = dma.done [#allocation13], 16
        $region52: #{tpu_custom_call.1} parent=35 // pred_fallthru
          _
        %s293 = sand.u32 %s59, 1
        %s294 = scalar_lea.sflag [#allocation7], %s293
        %s295 = sand.u32 %s59, 1
        %s296 = smul.addr %s295, 32
        %s297 = scalar_lea.vmem [#allocation6], %s296
        %p298 = pneg %p72
        %p299 = pneg %p69
        %s300 = sand.u32 %s33, 1
        %s301 = scalar_lea.sflag [#allocation10], %s300
        %s302 = sand.u32 %s89, 1
        %s303 = smul.addr %s302, 64
        %s304 = scalar_lea.vmem [#allocation9], %s303
        %p305 = pneg %p102
        %p306 = pneg %p99
        %p307 = pneg %p123
        %p308 = pneg %p120
        %p309 = pneg %p144
        %p310 = pneg %p141
        %p311 = pneg %p170
        %p312 = pneg %p167
        %s313 = sand.u32 %s157, 1
        %s314 = scalar_lea.sflag [#allocation8], %s313
        %s315 = sand.u32 %s157, 1
        %s316 = smul.addr %s315, 32
        %s317 = scalar_lea.vmem [#allocation14], %s316
        %s318 = sadd.s32 %s37, %s38
        %s319 = sld [smem:[#allocation4 + %s318]]
        %s320 = smul.u32 8, %s37
        %s321 = sadd.s32 %s37, %s38
        %s322 = sld [smem:[#allocation4 + %s321]]
        %s323 = smul.u32 16, %s322
        %s324 = smul.u32 8, %s37
        %p326 = scmp.eq.s32.totalorder %s38, 0
        // Predicated region
        $region53: #{tpu_custom_call.1} parent=35 // pred_check
          %p327 = pneg %p326
        $region54: #{tpu_custom_call.1} parent=35 // pred_check_branch
          %329 = sbr.rel (%p327) target = $region56
        $region55: #{tpu_custom_call.1} parent=35 // pred_region
          %330 = vst [vmem:[#allocation2] sm:$0xff] 0.0
          %331 = vst [vmem:[#allocation2 + $0x8] sm:$0xff] 0.0
          %332 = vst [vmem:[#allocation2 + $0x10] sm:$0xff] 0.0
          %333 = vst [vmem:[#allocation2 + $0x18] sm:$0xff] 0.0
          %334 = vst [vmem:[#allocation2 + $0x20] sm:$0xff] 0.0
          %335 = vst [vmem:[#allocation2 + $0x28] sm:$0xff] 0.0
          %336 = vst [vmem:[#allocation2 + $0x30] sm:$0xff] 0.0
          %337 = vst [vmem:[#allocation2 + $0x38] sm:$0xff] 0.0
        $region56: #{tpu_custom_call.1} parent=35 // pred_fallthru
          _
        %s338 = sld [smem:[#allocation5 + %s37]]
        %p339 = scmp.lt.s32.totalorder %s38, %s338
        // Predicated region
        $region57: #{tpu_custom_call.1} parent=35 // pred_check
          %p340 = pneg %p339
        $region58: #{tpu_custom_call.1} parent=35 // pred_check_branch
          %342 = sbr.rel (%p340) target = $region60
        $region59: #{tpu_custom_call.1} parent=35 // pred_region
          %v343 = vld [vmem:[%s280] sm:$0xf]
          %v344 = vld [vmem:[%s280 + $0x4] sm:$0xf]
          %v345 = vld [vmem:[%s280 + $0x8] sm:$0xf]
          %v346 = vld [vmem:[%s280 + $0xc] sm:$0xf]
          %v347 = vld [vmem:[%s280 + $0x10] sm:$0xf]
          %v348 = vld [vmem:[%s280 + $0x14] sm:$0xf]
          %v349 = vld [vmem:[%s280 + $0x18] sm:$0xf]
          %v350 = vld [vmem:[%s280 + $0x1c] sm:$0xf]
          %v351 = vld [vmem:[%s280 + $0x20] sm:$0xf]
          %v352 = vld [vmem:[%s280 + $0x24] sm:$0xf]
          %v353 = vld [vmem:[%s280 + $0x28] sm:$0xf]
          %v354 = vld [vmem:[%s280 + $0x2c] sm:$0xf]
          %v355 = vld [vmem:[%s280 + $0x30] sm:$0xf]
          %v356 = vld [vmem:[%s280 + $0x34] sm:$0xf]
          %v357 = vld [vmem:[%s280 + $0x38] sm:$0xf]
          %v358 = vld [vmem:[%s280 + $0x3c] sm:$0xf]
          %v359 = vld [vmem:[#allocation11] sm:$0xf]
          %v360 = vld [vmem:[#allocation11 + $0x4] sm:$0xf]
          %v361 = vld [vmem:[#allocation11 + $0x8] sm:$0xf]
          %v362 = vld [vmem:[#allocation11 + $0xc] sm:$0xf]
          %v363 = vld [vmem:[#allocation11 + $0x10] sm:$0xf]
          %v364 = vld [vmem:[#allocation11 + $0x14] sm:$0xf]
          %v365 = vld [vmem:[#allocation11 + $0x18] sm:$0xf]
          %v366 = vld [vmem:[#allocation11 + $0x1c] sm:$0xf]
          %v367 = vld [vmem:[#allocation11 + $0x20] sm:$0xf]
          %v368 = vld [vmem:[#allocation11 + $0x24] sm:$0xf]
          %v369 = vld [vmem:[#allocation11 + $0x28] sm:$0xf]
          %v370 = vld [vmem:[#allocation11 + $0x2c] sm:$0xf]
          %v371 = vld [vmem:[#allocation11 + $0x30] sm:$0xf]
          %v372 = vld [vmem:[#allocation11 + $0x34] sm:$0xf]
          %v373 = vld [vmem:[#allocation11 + $0x38] sm:$0xf]
          %v374 = vld [vmem:[#allocation11 + $0x3c] sm:$0xf]
          %v391 = vunpack.c.l.b16 %v343
          %v392 = vunpack.c.l.b16 %v344
          %v393 = vunpack.c.l.b16 %v345
          %v394 = vunpack.c.l.b16 %v346
          %v395 = vunpack.c.l.b16 %v347
          %v396 = vunpack.c.l.b16 %v348
          %v397 = vunpack.c.l.b16 %v349
          %v398 = vunpack.c.l.b16 %v350
          %v399 = vunpack.c.l.b16 %v351
          %v400 = vunpack.c.l.b16 %v352
          %v401 = vunpack.c.l.b16 %v353
          %v402 = vunpack.c.l.b16 %v354
          %v403 = vunpack.c.l.b16 %v355
          %v404 = vunpack.c.l.b16 %v356
          %v405 = vunpack.c.l.b16 %v357
          %v406 = vunpack.c.l.b16 %v358
          %v407 = vpack.c.b16 %v392, %v391
          %v408 = vpack.c.b16 %v394, %v393
          %v409 = vpack.c.b16 %v396, %v395
          %v410 = vpack.c.b16 %v398, %v397
          %v411 = vpack.c.b16 %v400, %v399
          %v412 = vpack.c.b16 %v402, %v401
          %v413 = vpack.c.b16 %v404, %v403
          %v414 = vpack.c.b16 %v406, %v405
          %v439 = vunpack.c.l.b16 %v359
          %v440 = vunpack.c.l.b16 %v360
          %v441 = vunpack.c.l.b16 %v361
          %v442 = vunpack.c.l.b16 %v362
          %v443 = vunpack.c.l.b16 %v363
          %v444 = vunpack.c.l.b16 %v364
          %v445 = vunpack.c.l.b16 %v365
          %v446 = vunpack.c.l.b16 %v366
          %v447 = vunpack.c.l.b16 %v367
          %v448 = vunpack.c.l.b16 %v368
          %v449 = vunpack.c.l.b16 %v369
          %v450 = vunpack.c.l.b16 %v370
          %v451 = vunpack.c.l.b16 %v371
          %v452 = vunpack.c.l.b16 %v372
          %v453 = vunpack.c.l.b16 %v373
          %v454 = vunpack.c.l.b16 %v374
          %v455 = vpack.c.b16 %v440, %v439
          %v456 = vpack.c.b16 %v442, %v441
          %v457 = vpack.c.b16 %v444, %v443
          %v458 = vpack.c.b16 %v446, %v445
          %v459 = vpack.c.b16 %v448, %v447
          %v460 = vpack.c.b16 %v450, %v449
          %v461 = vpack.c.b16 %v452, %v451
          %v462 = vpack.c.b16 %v454, %v453
          %471 = vmatprep.subr.bf16.mxu0 0
          %472 = vmatpush1.bf16.msra.mxu0 %v455
          %473 = vmatprep.subr.bf16.mxu0 0
          %474 = vmatpush1.bf16.msra.mxu0 %v456
          %475 = vmatprep.subr.bf16.mxu0 0
          %476 = vmatpush1.bf16.msra.mxu0 %v457
          %477 = vmatprep.subr.bf16.mxu0 0
          %478 = vmatpush1.bf16.msra.mxu0 %v458
          %479 = vmatprep.subr.bf16.mxu0 0
          %480 = vmatpush1.bf16.msra.mxu0 %v459
          %481 = vmatprep.subr.bf16.mxu0 0
          %482 = vmatpush1.bf16.msra.mxu0 %v460
          %483 = vmatprep.subr.bf16.mxu0 0
          %484 = vmatpush1.bf16.msra.mxu0 %v461
          %485 = vmatprep.subr.bf16.mxu0 0
          %486 = vmatpush1.bf16.msra.mxu0 %v462
          %487 = vmatprep.subr.bf16.mxu0 0
          %488 = vmatpush1.bf16.msra.mxu0 0
          %489 = vmatprep.subr.bf16.mxu0 0
          %490 = vmatpush1.bf16.msra.mxu0 0
          %491 = vmatprep.subr.bf16.mxu0 0
          %492 = vmatpush1.bf16.msra.mxu0 0
          %493 = vmatprep.subr.bf16.mxu0 0
          %494 = vmatpush1.bf16.msra.mxu0 0
          %495 = vmatprep.subr.bf16.mxu0 0
          %496 = vmatpush1.bf16.msra.mxu0 0
          %497 = vmatprep.subr.bf16.mxu0 0
          %498 = vmatpush1.bf16.msra.mxu0 0
          %499 = vmatprep.subr.bf16.mxu0 0
          %500 = vmatpush1.bf16.msra.mxu0 0
          %501 = vmatprep.subr.bf16.mxu0 0
          %502 = vmatpush1.bf16.msra.mxu0 0
          %503 = vmatprep.mubr.bf16.mxu0 0
          %504 = vmatmul.mubr.bf16.gmra.mrb[0].mxu0 %v407
          %v505 = vpop.f32.mrb[0].mxu0
          %v506 = vadd.f32 0.0, %v505
          %v507 = vpop.f32.mrb[0].mxu0
          %v508 = vpop.f32.mrb[0].mxu0
          %v509 = vadd.f32 0.0, %v508
          %v510 = vpop.f32.mrb[0].mxu0
          %511 = vmatprep.mubr.bf16.mxu0 0
          %512 = vmatmul.mubr.bf16.gmra.mrb[0].mxu0 %v408
          %v513 = vpop.f32.mrb[0].mxu0
          %v514 = vadd.f32 0.0, %v513
          %v515 = vpop.f32.mrb[0].mxu0
          %v516 = vpop.f32.mrb[0].mxu0
          %v517 = vadd.f32 0.0, %v516
          %v518 = vpop.f32.mrb[0].mxu0
          %519 = vmatprep.mubr.bf16.mxu0 0
          %520 = vmatmul.mubr.bf16.gmra.mrb[0].mxu0 %v409
          %v521 = vpop.f32.mrb[0].mxu0
          %v522 = vadd.f32 0.0, %v521
          %v523 = vpop.f32.mrb[0].mxu0
          %v524 = vpop.f32.mrb[0].mxu0
          %v525 = vadd.f32 0.0, %v524
          %v526 = vpop.f32.mrb[0].mxu0
          %527 = vmatprep.mubr.bf16.mxu0 0
          %528 = vmatmul.mubr.bf16.gmra.mrb[0].mxu0 %v410
          %v529 = vpop.f32.mrb[0].mxu0
          %v530 = vadd.f32 0.0, %v529
          %v531 = vpop.f32.mrb[0].mxu0
          %v532 = vpop.f32.mrb[0].mxu0
          %v533 = vadd.f32 0.0, %v532
          %v534 = vpop.f32.mrb[0].mxu0
          %535 = vmatprep.mubr.bf16.mxu0 0
          %536 = vmatmul.mubr.bf16.gmra.mrb[0].mxu0 %v411
          %v537 = vpop.f32.mrb[0].mxu0
          %v538 = vadd.f32 0.0, %v537
          %v539 = vpop.f32.mrb[0].mxu0
          %v540 = vpop.f32.mrb[0].mxu0
          %v541 = vadd.f32 0.0, %v540
          %v542 = vpop.f32.mrb[0].mxu0
          %543 = vmatprep.mubr.bf16.mxu0 0
          %544 = vmatmul.mubr.bf16.gmra.mrb[0].mxu0 %v412
          %v545 = vpop.f32.mrb[0].mxu0
          %v546 = vadd.f32 0.0, %v545
          %v547 = vpop.f32.mrb[0].mxu0
          %v548 = vpop.f32.mrb[0].mxu0
          %v549 = vadd.f32 0.0, %v548
          %v550 = vpop.f32.mrb[0].mxu0
          %551 = vmatprep.mubr.bf16.mxu0 0
          %552 = vmatmul.mubr.bf16.gmra.mrb[0].mxu0 %v413
          %v553 = vpop.f32.mrb[0].mxu0
          %v554 = vadd.f32 0.0, %v553
          %v555 = vpop.f32.mrb[0].mxu0
          %v556 = vpop.f32.mrb[0].mxu0
          %v557 = vadd.f32 0.0, %v556
          %v558 = vpop.f32.mrb[0].mxu0
          %559 = vmatprep.mubr.bf16.mxu0 0
          %560 = vmatmul.mubr.bf16.gmra.mrb[0].mxu0 %v414
          %v561 = vpop.f32.mrb[0].mxu0
          %v562 = vadd.f32 0.0, %v561
          %v563 = vpop.f32.mrb[0].mxu0
          %v564 = vpop.f32.mrb[0].mxu0
          %v565 = vadd.f32 0.0, %v564
          %v566 = vpop.f32.mrb[0].mxu0
          %567 = vdwg.mxu0
          %v568 = vpack.c.bf16 %v509, %v506
          %v569 = vpack.c.bf16 %v517, %v514
          %v570 = vpack.c.bf16 %v525, %v522
          %v571 = vpack.c.bf16 %v533, %v530
          %v572 = vpack.c.bf16 %v541, %v538
          %v573 = vpack.c.bf16 %v549, %v546
          %v574 = vpack.c.bf16 %v557, %v554
          %v575 = vpack.c.bf16 %v565, %v562
          %v576 = vld [vmem:[#allocation2] sm:$0xff]
          %v577 = vld [vmem:[#allocation2 + $0x8] sm:$0xff]
          %v578 = vld [vmem:[#allocation2 + $0x10] sm:$0xff]
          %v579 = vld [vmem:[#allocation2 + $0x18] sm:$0xff]
          %v580 = vld [vmem:[#allocation2 + $0x20] sm:$0xff]
          %v581 = vld [vmem:[#allocation2 + $0x28] sm:$0xff]
          %v582 = vld [vmem:[#allocation2 + $0x30] sm:$0xff]
          %v583 = vld [vmem:[#allocation2 + $0x38] sm:$0xff]
          %v584 = vld [vmem:[%s271] sm:$0xf]
          %v585 = vld [vmem:[%s271 + $0x4] sm:$0xf]
          %v586 = vld [vmem:[%s271 + $0x8] sm:$0xf]
          %v587 = vld [vmem:[%s271 + $0xc] sm:$0xf]
          %v588 = vld [vmem:[%s271 + $0x10] sm:$0xf]
          %v589 = vld [vmem:[%s271 + $0x14] sm:$0xf]
          %v590 = vld [vmem:[%s271 + $0x18] sm:$0xf]
          %v591 = vld [vmem:[%s271 + $0x1c] sm:$0xf]
          %v600 = vunpack.c.l.b16 %v584
          %v601 = vunpack.c.l.b16 %v585
          %v602 = vunpack.c.l.b16 %v586
          %v603 = vunpack.c.l.b16 %v587
          %v604 = vunpack.c.l.b16 %v588
          %v605 = vunpack.c.l.b16 %v589
          %v606 = vunpack.c.l.b16 %v590
          %v607 = vunpack.c.l.b16 %v591
          %v608 = vpack.c.b16 %v601, %v600
          %v609 = vpack.c.b16 %v603, %v602
          %v610 = vpack.c.b16 %v605, %v604
          %v611 = vpack.c.b16 %v607, %v606
          %616 = vmatprep.subr.bf16.mxu0 0
          %617 = vmatpush1.bf16.msra.mxu0 %v568
          %618 = vmatprep.subr.bf16.mxu0 0
          %619 = vmatpush1.bf16.msra.mxu0 %v569
          %620 = vmatprep.subr.bf16.mxu0 0
          %621 = vmatpush1.bf16.msra.mxu0 %v570
          %622 = vmatprep.subr.bf16.mxu0 0
          %623 = vmatpush1.bf16.msra.mxu0 %v571
          %624 = vmatprep.subr.bf16.mxu0 0
          %625 = vmatpush1.bf16.msra.mxu0 %v572
          %626 = vmatprep.subr.bf16.mxu0 0
          %627 = vmatpush1.bf16.msra.mxu0 %v573
          %628 = vmatprep.subr.bf16.mxu0 0
          %629 = vmatpush1.bf16.msra.mxu0 %v574
          %630 = vmatprep.subr.bf16.mxu0 0
          %631 = vmatpush1.bf16.msra.mxu0 %v575
          %632 = vmatprep.subr.bf16.mxu0 0
          %633 = vmatpush1.bf16.msra.mxu0 0
          %634 = vmatprep.subr.bf16.mxu0 0
          %635 = vmatpush1.bf16.msra.mxu0 0
          %636 = vmatprep.subr.bf16.mxu0 0
          %637 = vmatpush1.bf16.msra.mxu0 0
          %638 = vmatprep.subr.bf16.mxu0 0
          %639 = vmatpush1.bf16.msra.mxu0 0
          %640 = vmatprep.subr.bf16.mxu0 0
          %641 = vmatpush1.bf16.msra.mxu0 0
          %642 = vmatprep.subr.bf16.mxu0 0
          %643 = vmatpush1.bf16.msra.mxu0 0
          %644 = vmatprep.subr.bf16.mxu0 0
          %645 = vmatpush1.bf16.msra.mxu0 0
          %646 = vmatprep.subr.bf16.mxu0 0
          %647 = vmatpush1.bf16.msra.mxu0 0
          %648 = vmatprep.mubr.bf16.mxu0 0
          %649 = vmatmul.mubr.bf16.gmra.mrb[0].mxu0 %v608
          %v650 = vpop.f32.mrb[0].mxu0
          %v651 = vadd.f32 0.0, %v650
          %v652 = vpop.f32.mrb[0].mxu0
          %v653 = vpop.f32.mrb[0].mxu0
          %v654 = vadd.f32 0.0, %v653
          %v655 = vpop.f32.mrb[0].mxu0
          %656 = vmatprep.mubr.bf16.mxu0 0
          %657 = vmatmul.mubr.bf16.gmra.mrb[0].mxu0 %v609
          %v658 = vpop.f32.mrb[0].mxu0
          %v659 = vadd.f32 0.0, %v658
          %v660 = vpop.f32.mrb[0].mxu0
          %v661 = vpop.f32.mrb[0].mxu0
          %v662 = vadd.f32 0.0, %v661
          %v663 = vpop.f32.mrb[0].mxu0
          %664 = vmatprep.mubr.bf16.mxu0 0
          %665 = vmatmul.mubr.bf16.gmra.mrb[0].mxu0 %v610
          %v666 = vpop.f32.mrb[0].mxu0
          %v667 = vadd.f32 0.0, %v666
          %v668 = vpop.f32.mrb[0].mxu0
          %v669 = vpop.f32.mrb[0].mxu0
          %v670 = vadd.f32 0.0, %v669
          %v671 = vpop.f32.mrb[0].mxu0
          %672 = vmatprep.mubr.bf16.mxu0 0
          %673 = vmatmul.mubr.bf16.gmra.mrb[0].mxu0 %v611
          %v674 = vpop.f32.mrb[0].mxu0
          %v675 = vadd.f32 0.0, %v674
          %v676 = vpop.f32.mrb[0].mxu0
          %v677 = vpop.f32.mrb[0].mxu0
          %v678 = vadd.f32 0.0, %v677
          %v679 = vpop.f32.mrb[0].mxu0
          %680 = vdwg.mxu0
          %v681 = vadd.f32 %v576, %v651
          %v682 = vadd.f32 %v577, %v654
          %v683 = vadd.f32 %v578, %v659
          %v684 = vadd.f32 %v579, %v662
          %v685 = vadd.f32 %v580, %v667
          %v686 = vadd.f32 %v581, %v670
          %v687 = vadd.f32 %v582, %v675
          %v688 = vadd.f32 %v583, %v678
          %689 = vst [vmem:[#allocation2] sm:$0xff] %v681
          %690 = vst [vmem:[#allocation2 + $0x8] sm:$0xff] %v682
          %691 = vst [vmem:[#allocation2 + $0x10] sm:$0xff] %v683
          %692 = vst [vmem:[#allocation2 + $0x18] sm:$0xff] %v684
          %693 = vst [vmem:[#allocation2 + $0x20] sm:$0xff] %v685
          %694 = vst [vmem:[#allocation2 + $0x28] sm:$0xff] %v686
          %695 = vst [vmem:[#allocation2 + $0x30] sm:$0xff] %v687
          %696 = vst [vmem:[#allocation2 + $0x38] sm:$0xff] %v688
        $region60: #{tpu_custom_call.1} parent=35 // pred_fallthru
          _
        // Predicated region
        $region61: #{tpu_custom_call.1} parent=35 // pred_check
          %p697 = pneg %p326
        $region62: #{tpu_custom_call.1} parent=35 // pred_check_branch
          %699 = sbr.rel (%p697) target = $region64
        $region63: #{tpu_custom_call.1} parent=35 // pred_region
          %v700 = vld [vmem:[#allocation2] sm:$0xff]
          %v701 = vld [vmem:[#allocation2 + $0x8] sm:$0xff]
          %v702 = vld [vmem:[#allocation2 + $0x10] sm:$0xff]
          %v703 = vld [vmem:[#allocation2 + $0x18] sm:$0xff]
          %v704 = vld [vmem:[#allocation2 + $0x20] sm:$0xff]
          %v705 = vld [vmem:[#allocation2 + $0x28] sm:$0xff]
          %v706 = vld [vmem:[#allocation2 + $0x30] sm:$0xff]
          %v707 = vld [vmem:[#allocation2 + $0x38] sm:$0xff]
          %v708 = vld [vmem:[#allocation12] sm:$0x1]
          %v710 = vlaneseq
          %v711 = vshrl.u32 %v710, 7
          %v712 = vsub.s32 0, %v711
          %v713 = vrot.slane %v708, %v712
          %v715 = vadd.f32 %v700, %v713
          %v716 = vadd.f32 %v701, %v713
          %v717 = vadd.f32 %v702, %v713
          %v718 = vadd.f32 %v703, %v713
          %v719 = vadd.f32 %v704, %v713
          %v720 = vadd.f32 %v705, %v713
          %v721 = vadd.f32 %v706, %v713
          %v722 = vadd.f32 %v707, %v713
          %v723 = vmax.f32 %v715, 0.0
          %v724 = vmax.f32 %v716, 0.0
          %v725 = vmax.f32 %v717, 0.0
          %v726 = vmax.f32 %v718, 0.0
          %v727 = vmax.f32 %v719, 0.0
          %v728 = vmax.f32 %v720, 0.0
          %v729 = vmax.f32 %v721, 0.0
          %v730 = vmax.f32 %v722, 0.0
          %v731 = vpack.c.bf16 %v724, %v723
          %v732 = vpack.c.bf16 %v726, %v725
          %v733 = vpack.c.bf16 %v728, %v727
          %v734 = vpack.c.bf16 %v730, %v729
          %v739 = vunpack.c.l.b16 %v731
          %v740 = vunpack.c.h.b16 %v731
          %v741 = vunpack.c.l.b16 %v732
          %v742 = vunpack.c.h.b16 %v732
          %v743 = vunpack.c.l.b16 %v733
          %v744 = vunpack.c.h.b16 %v733
          %v745 = vunpack.c.l.b16 %v734
          %v746 = vunpack.c.h.b16 %v734
          %v747 = vpack.c.b16 %v739, %v739
          %v748 = vpack.c.b16 %v740, %v740
          %v749 = vpack.c.b16 %v741, %v741
          %v750 = vpack.c.b16 %v742, %v742
          %v751 = vpack.c.b16 %v743, %v743
          %v752 = vpack.c.b16 %v744, %v744
          %v753 = vpack.c.b16 %v745, %v745
          %v754 = vpack.c.b16 %v746, %v746
          %763 = vst [vmem:[%s317] sm:$0xf] %v747
          %764 = vst [vmem:[%s317 + $0x4] sm:$0xf] %v748
          %765 = vst [vmem:[%s317 + $0x8] sm:$0xf] %v749
          %766 = vst [vmem:[%s317 + $0xc] sm:$0xf] %v750
          %767 = vst [vmem:[%s317 + $0x10] sm:$0xf] %v751
          %768 = vst [vmem:[%s317 + $0x14] sm:$0xf] %v752
          %769 = vst [vmem:[%s317 + $0x18] sm:$0xf] %v753
          %770 = vst [vmem:[%s317 + $0x1c] sm:$0xf] %v754
        $region64: #{tpu_custom_call.1} parent=35 // pred_fallthru
          _
        %s771 = sand.u32 %s157, 1
        %s772 = scalar_lea.sflag [#allocation8], %s771
        %s773 = sand.u32 %s157, 1
        %s774 = smul.addr %s773, 32
        %s775 = scalar_lea.vmem [#allocation14], %s774
        // Predicated region
        $region65: #{tpu_custom_call.1} parent=35 // pred_check
          %p776 = pneg %p167
        $region66: #{tpu_custom_call.1} parent=35 // pred_check_branch
          %778 = sbr.rel (%p776) target = $region68
        $region67: #{tpu_custom_call.1} parent=35 // pred_region
          %s779 = smul.u32 8, %s37
          %s781 = ssub.s32 512, 512
          %782 = vsyncadd %s772, %s781
          %s783 = smul.addr %s779, 64
          %s784 = scalar_lea.hbm %s6, %s783
          %s785 = sshll.u32 %s775, 4
          %s786 = int_to_ptr.vmem [resolvable:$true] %s785
          %791 = dma.vmem_to_hbm [thread:$0]  %s786, 512, %s784, %s772, 64, 64, 4
        $region68: #{tpu_custom_call.1} parent=35 // pred_fallthru
          _
      $region36: #{tpu_custom_call.1} parent=5 // pred_fallthru
        _
      %p792 = scmp.le.s32.totalorder 2, %s28
      // Predicated region
      $region69: #{tpu_custom_call.1} parent=5 // pred_check
        %p793 = pneg %p792
      $region70: #{tpu_custom_call.1} parent=5 // pred_check_branch
        %795 = sbr.rel (%p793) target = $region72
      $region71: #{tpu_custom_call.1} parent=5 // pred_region
        %s796 = ssub.s32 %s28, 2
        // Predicated region
        $region73: #{tpu_custom_call.1} parent=71 // pred_check
          %p797 = pneg %p173
        $region74: #{tpu_custom_call.1} parent=71 // pred_check_branch
          %799 = sbr.rel (%p797) target = $region76
        $region75: #{tpu_custom_call.1} parent=71 // pred_region
          %s800 = sand.u32 %s158, 1
          %s801 = scalar_lea.sflag [#allocation8], %s800
          %s802 = sand.u32 %s158, 1
          %s803 = smul.addr %s802, 32
          %s804 = scalar_lea.vmem [#allocation14], %s803
          %805 = dma.done %s801, 512
        $region76: #{tpu_custom_call.1} parent=71 // pred_fallthru
          _
      $region72: #{tpu_custom_call.1} parent=5 // pred_fallthru
        _
    $region6: #{tpu_custom_call.1} parent=1 // loop_footer
      %s32 = sadd.s32 1, %s28
    $region7: #{tpu_custom_call.1} parent=1 // loop_footer_branch
      %27 = sbr.rel target = $region3
    $region8: #{tpu_custom_call.1} parent=1 // loop_exit
      _
    %806 = vsyncpa [#allocation7], 1
    %s807 = scalar_lea.sflag [#allocation7], 1
    %808 = vsyncpa %s807, 1
    %809 = vsyncpa [#allocation10], 1
    %s810 = scalar_lea.sflag [#allocation10], 1
    %811 = vsyncpa %s810, 1
    %812 = vsyncpa [#allocation13], 1
    %813 = vsyncpa [#allocation8], 1
    %s814 = scalar_lea.sflag [#allocation8], 1
    %815 = vsyncpa %s814, 1

</llo_original>
